<compile_context>
chip_gen: v7x
topology: tpu7x:2x2x1
jax: 0.10.0
libtpu: 0.0.40
codegen_flags: <defaults>
</compile_context>

<pallas_src>
from functools import partial

import numpy as np
import jax
import jax.numpy as jnp
from jax.experimental import pallas as pl
from jax.experimental.pallas import tpu as pltpu

EPS = 1e-5
F32 = jnp.float32
BF16 = jnp.bfloat16


def _dot(a, b):
    # Cast operands to bf16 right before the MXU dot; accumulate in f32.
    return jnp.dot(a.astype(BF16), b.astype(BF16), preferred_element_type=F32)


# ----------------------------------------------------------------------------
# Kernel 1: Linear (BN folded into W / shift) + ReLU  -- used by GridPool.fc
# ----------------------------------------------------------------------------
def _linear_bn_relu_kernel(x_ref, w_ref, t_ref, o_ref):
    y = _dot(x_ref[...], w_ref[...]) + t_ref[...]
    o_ref[...] = jnp.maximum(y, 0.0)


def linear_bn_relu(x, w_folded, shift, tn=128):
    x = x.astype(F32)
    N, Cin = x.shape
    Cout = w_folded.shape[1]
    tn = min(tn, N)
    assert N % tn == 0
    tile = lambda i: (i, 0)
    full = lambda i: (0, 0)
    return pl.pallas_call(
        _linear_bn_relu_kernel,
        out_shape=jax.ShapeDtypeStruct((N, Cout), F32),
        grid_spec=pltpu.PrefetchScalarGridSpec(
            num_scalar_prefetch=0,
            grid=(N // tn,),
            in_specs=[pl.BlockSpec((tn, Cin), tile),
                      pl.BlockSpec((Cin, Cout), full),
                      pl.BlockSpec((1, Cout), full)],
            out_specs=pl.BlockSpec((tn, Cout), tile),
        ),
        compiler_params=pltpu.CompilerParams(dimension_semantics=("parallel",)),
    )(x, w_folded, shift)


# ----------------------------------------------------------------------------
# Kernel 2: fused fc1+norm1+ReLU  and  [q|k|v] projection (one (C,3C) matmul)
# ----------------------------------------------------------------------------
def _qkv_kernel(x_ref, w1_ref, t1_ref, wqkv_ref, bqkv_ref, o_ref, *, C):
    x = x_ref[...]
    h = jnp.maximum(_dot(x, w1_ref[...]) + t1_ref[...], 0.0)        # fc1 + norm1 + ReLU
    qkv = _dot(h, wqkv_ref[...]) + bqkv_ref[...]                    # [q|k|v]
    col = jax.lax.broadcasted_iota(jnp.int32, qkv.shape, 1)
    # BN+ReLU apply to the q and k parts only (first 2C columns); v is raw linear.
    o_ref[...] = jnp.where(col < 2 * C, jnp.maximum(qkv, 0.0), qkv)


def fused_qkv(feat, fp, tn=64):
    N, C = feat.shape
    tn = min(tn, N)
    assert N % tn == 0
    tile = lambda i: (i, 0)
    full = lambda i: (0, 0)
    return pl.pallas_call(
        partial(_qkv_kernel, C=C),
        out_shape=jax.ShapeDtypeStruct((N, 3 * C), F32),
        grid_spec=pltpu.PrefetchScalarGridSpec(
            num_scalar_prefetch=0,
            grid=(N // tn,),
            in_specs=[pl.BlockSpec((tn, C), tile),
                      pl.BlockSpec((C, C), full),
                      pl.BlockSpec((1, C), full),
                      pl.BlockSpec((C, 3 * C), full),
                      pl.BlockSpec((1, 3 * C), full)],
            out_specs=pl.BlockSpec((tn, 3 * C), tile),
        ),
        compiler_params=pltpu.CompilerParams(dimension_semantics=("parallel",)),
    )(feat, fp['w1f'], fp['t1'], fp['wqkvf'], fp['bqkvf'])


# ----------------------------------------------------------------------------
# Kernel 3: grouped-vector attention + full Block epilogue
#   (pe-bias MLP, weight encoding, softmax+mask, grouped weighted sum,
#    norm2+ReLU, fc3(+folded norm3), residual add, final ReLU)
# ----------------------------------------------------------------------------
def _gva_block_kernel(q_ref, key_ref, val_ref, pos_ref, mask_ref, id_ref,
                      wp1_ref, bp1_ref, wp2_ref, bp2_ref,
                      ww1_ref, bw1_ref, ww2_ref, bw2_ref,
                      n2s_ref, n2t_ref, w3_ref, t3_ref, o_ref, *, groups):
    q = q_ref[...]                                   # (T, C)
    key = key_ref[...]                               # (T, S, C) gathered keys
    val = val_ref[...]                               # (T, S, C) gathered values
    pos = pos_ref[...]                               # (T, S, 3) relative coords
    mask = mask_ref[...]                             # (T, S)    valid-neighbour mask
    T, S, C = key.shape
    G = groups
    I = C // G

    # pe_bias MLP: Linear(3,C)+BN(folded) -> ReLU -> Linear(C,C)
    # K=3 first layer as three VPU broadcast FMAs (keeps the MXU for real matmuls).
    wp1 = wp1_ref[...]
    h = (pos[:, :, 0:1] * wp1[0:1, :][None]
         + pos[:, :, 1:2] * wp1[1:2, :][None]
         + pos[:, :, 2:3] * wp1[2:3, :][None]
         + bp1_ref[...][None])
    h = jnp.maximum(h, 0.0)
    peb = (_dot(h.reshape(T * S, C), wp2_ref[...]) + bp2_ref[...]).reshape(T, S, C)

    rel = key - q[:, None, :] + peb
    val = val + peb

    # weight_encoding: Linear(C,G)+BN(folded) -> ReLU -> Linear(G,G)
    g1 = jnp.maximum(_dot(rel.reshape(T * S, C), ww1_ref[...]) + bw1_ref[...], 0.0)
    w = (_dot(g1, ww2_ref[...]) + bw2_ref[...]).reshape(T, S, G)

    # softmax over the neighbour axis (dim=1); mask applied AFTER softmax (as in torch)
    w = jnp.exp(w - jnp.max(w, axis=1, keepdims=True))
    w = w * pl.reciprocal(jnp.sum(w, axis=1, keepdims=True), approx=True)
    w = w * mask[:, :, None]

    # grouped weighted sum: out[n, g*I + i] = sum_s val[n, s, g*I + i] * w[n, s, g]
    parts = [jnp.sum(val[:, :, g * I:(g + 1) * I] * w[:, :, g:g + 1], axis=1)
             for g in range(G)]
    out = jnp.concatenate(parts, axis=-1)            # (T, C)

    # Block epilogue: norm2 + ReLU, fc3 (+ folded norm3), residual, ReLU
    a = jnp.maximum(out * n2s_ref[...] + n2t_ref[...], 0.0)
    y = _dot(a, w3_ref[...]) + t3_ref[...]
    o_ref[...] = jnp.maximum(y + id_ref[...], 0.0)


def gva_block(q, key_g, val_g, pos_g, mask, identity, fp, groups, tn=32):
    N, C = q.shape
    S = key_g.shape[1]
    G = groups
    tn = min(tn, N)
    assert N % tn == 0
    t2 = lambda i: (i, 0)
    t3 = lambda i: (i, 0, 0)
    full = lambda i: (0, 0)
    in_specs = [
        pl.BlockSpec((tn, C), t2),          # q
        pl.BlockSpec((tn, S, C), t3),       # gathered key
        pl.BlockSpec((tn, S, C), t3),       # gathered value
        pl.BlockSpec((tn, S, 3), t3),       # relative coords
        pl.BlockSpec((tn, S), t2),          # neighbour mask
        pl.BlockSpec((tn, C), t2),          # residual (block input)
        pl.BlockSpec((3, C), full),         # wp1 (BN folded)
        pl.BlockSpec((1, C), full),         # bp1 (BN folded)
        pl.BlockSpec((C, C), full),         # wp2
        pl.BlockSpec((1, C), full),         # bp2
        pl.BlockSpec((C, G), full),         # ww1 (BN folded)
        pl.BlockSpec((1, G), full),         # bw1 (BN folded)
        pl.BlockSpec((G, G), full),         # ww2
        pl.BlockSpec((1, G), full),         # bw2
        pl.BlockSpec((1, C), full),         # norm2 scale
        pl.BlockSpec((1, C), full),         # norm2 shift
        pl.BlockSpec((C, C), full),         # fc3 (norm3 folded)
        pl.BlockSpec((1, C), full),         # norm3 shift
    ]
    return pl.pallas_call(
        partial(_gva_block_kernel, groups=groups),
        out_shape=jax.ShapeDtypeStruct((N, C), F32),
        grid_spec=pltpu.PrefetchScalarGridSpec(
            num_scalar_prefetch=0,
            grid=(N // tn,),
            in_specs=in_specs,
            out_specs=pl.BlockSpec((tn, C), t2),
        ),
        compiler_params=pltpu.CompilerParams(
            dimension_semantics=("parallel",),
            vmem_limit_bytes=32 * 1024 * 1024),
    )(q, key_g, val_g, pos_g, mask, identity,
      fp['wp1f'], fp['bp1f'], fp['wp2'], fp['bp2'],
      fp['ww1f'], fp['bw1f'], fp['ww2'], fp['bw2'],
      fp['n2_s'], fp['n2_t'], fp['w3f'], fp['t3'])


# ----------------------------------------------------------------------------
# Parameter initialization (deterministic, shapes from the module __init__)
# ----------------------------------------------------------------------------
def init_linear(key, cin, cout, bias=True):
    kw, kb = jax.random.split(key)
    bound = 1.0 / np.sqrt(cin)
    w = jax.random.uniform(kw, (cin, cout), F32, -bound, bound)
    b = jax.random.uniform(kb, (1, cout), F32, -bound, bound) if bias else None
    return w, b


def init_bn(key, c):
    k1, k2, k3, k4 = jax.random.split(key, 4)
    gamma = 1.0 + 0.1 * jax.random.normal(k1, (c,), F32)
    beta = 0.1 * jax.random.normal(k2, (c,), F32)
    mean = 0.1 * jax.random.normal(k3, (c,), F32)
    var = 1.0 + 0.1 * jax.random.uniform(k4, (c,), F32)
    scale = gamma / jnp.sqrt(var + EPS)
    shift = beta - mean * scale
    return scale.reshape(1, c), shift.reshape(1, c)


def init_block_params(key, C, G):
    ks = jax.random.split(key, 16)
    p = {}
    p['fc1_w'], _ = init_linear(ks[0], C, C, bias=False)
    p['n1_s'], p['n1_t'] = init_bn(ks[1], C)
    p['q_w'], p['q_b'] = init_linear(ks[2], C, C, True)
    p['qn_s'], p['qn_t'] = init_bn(ks[3], C)
    p['k_w'], p['k_b'] = init_linear(ks[4], C, C, True)
    p['kn_s'], p['kn_t'] = init_bn(ks[5], C)
    p['v_w'], p['v_b'] = init_linear(ks[6], C, C, True)
    p['wp1'], p['bp1'] = init_linear(ks[7], 3, C, True)
    p['pn_s'], p['pn_t'] = init_bn(ks[8], C)
    p['wp2'], p['bp2'] = init_linear(ks[9], C, C, True)
    p['ww1'], p['bw1'] = init_linear(ks[10], C, G, True)
    p['wn_s'], p['wn_t'] = init_bn(ks[11], G)
    p['ww2'], p['bw2'] = init_linear(ks[12], G, G, True)
    p['n2_s'], p['n2_t'] = init_bn(ks[13], C)
    p['fc3_w'], _ = init_linear(ks[14], C, C, bias=False)
    p['n3_s'], p['n3_t'] = init_bn(ks[15], C)
    return p


def fold_block_params(p):
    """Fold eval-mode BatchNorm scale/shift into the preceding Linear layers."""
    f = {}
    f['w1f'] = p['fc1_w'] * p['n1_s']
    f['t1'] = p['n1_t']
    wq = p['q_w'] * p['qn_s']
    bq = p['q_b'] * p['qn_s'] + p['qn_t']
    wk = p['k_w'] * p['kn_s']
    bk = p['k_b'] * p['kn_s'] + p['kn_t']
    f['wqkvf'] = jnp.concatenate([wq, wk, p['v_w']], axis=1)      # (C, 3C)
    f['bqkvf'] = jnp.concatenate([bq, bk, p['v_b']], axis=1)      # (1, 3C)
    f['wp1f'] = p['wp1'] * p['pn_s']
    f['bp1f'] = p['bp1'] * p['pn_s'] + p['pn_t']
    f['wp2'] = p['wp2']
    f['bp2'] = p['bp2']
    f['ww1f'] = p['ww1'] * p['wn_s']
    f['bw1f'] = p['bw1'] * p['wn_s'] + p['wn_t']
    f['ww2'] = p['ww2']
    f['bw2'] = p['bw2']
    f['n2_s'] = p['n2_s']
    f['n2_t'] = p['n2_t']
    f['w3f'] = p['fc3_w'] * p['n3_s']
    f['t3'] = p['n3_t']
    return f


# ----------------------------------------------------------------------------
# Host-side glue: voxel-grid clustering & knn (data-dependent index preprocessing)
# ----------------------------------------------------------------------------
def grid_pool_cluster(coord_np, batch_np, grid_size):
    nb = int(batch_np.max()) + 1
    start = np.zeros((nb, 3), dtype=np.float64)
    for b in range(nb):
        start[b] = coord_np[batch_np == b].min(axis=0)
    pos = coord_np.astype(np.float64) - start[batch_np]
    ext = np.concatenate([pos, batch_np[:, None].astype(np.float64)], axis=1)
    size = np.array([grid_size, grid_size, grid_size, 1.0])
    end = ext.max(axis=0)
    nvox = (end / size).astype(np.int64) + 1
    vox = (ext / size).astype(np.int64)
    strides = np.cumprod(np.concatenate([[1], nvox[:-1]]))
    raw = (vox * strides).sum(axis=1)
    _, inv, counts = np.unique(raw, return_inverse=True, return_counts=True)
    return inv.astype(np.int32), counts.astype(np.int32)


def knn_query(k, coord_np, batch_np):
    # pointops.knn_query equivalent: k nearest within the same batch (self included);
    # batches with fewer than k points are padded with -1 (masked in the kernel).
    d = ((coord_np[:, None, :] - coord_np[None, :, :]) ** 2).sum(-1)
    d = np.where(batch_np[:, None] == batch_np[None, :], d, np.inf)
    idx = np.argsort(d, axis=1, kind="stable")[:, :k]
    dk = np.take_along_axis(d, idx, axis=1)
    idx = np.where(np.isinf(dk), -1, idx)
    return idx.astype(np.int32)


# ----------------------------------------------------------------------------
# Block: two fused Pallas kernels + an XLA neighbour gather in between
# ----------------------------------------------------------------------------
def run_block(feat, coord, idx, mask, fp, groups, tn_lin=64, tn_attn=32):
    N, C = feat.shape
    qkv = fused_qkv(feat, fp, tn=tn_lin)                # (N, 3C): q|k|v
    q, k, v = qkv[:, :C], qkv[:, C:2 * C], qkv[:, 2 * C:]
    idx_c = jnp.maximum(idx, 0)
    # Neighbour gather stays an XLA gather (pointops.grouping equivalent);
    # all dense math runs inside the Pallas kernels.
    key_g = jnp.take(k, idx_c, axis=0)                           # (N, S, C)
    val_g = jnp.take(v, idx_c, axis=0)                           # (N, S, C)
    pos_g = jnp.take(coord, idx_c, axis=0) - coord[:, None, :]   # (N, S, 3)
    return gva_block(q, key_g, val_g, pos_g, mask, feat, fp, groups, tn=tn_attn)


# ----------------------------------------------------------------------------
# Main
# ----------------------------------------------------------------------------
if __name__ == "__main__":
    key = jax.random.PRNGKey(0)

    # Encoder config (small)
    depth = 2
    in_channels = 8
    embed_channels = 32
    groups = 4
    grid_size = 0.25
    neighbours = 16

    # input point cloud: 2 batches (160 + 96 points)
    counts_batch = [160, 96]
    N_in = sum(counts_batch)                            # 256
    batch_np = np.concatenate([np.full(c, i, np.int64) for i, c in enumerate(counts_batch)])
    k_coord, k_feat, k_par = jax.random.split(key, 3)
    coord = jax.random.uniform(k_coord, (N_in, 3), F32)
    feat = jax.random.normal(k_feat, (N_in, in_channels), F32)

    # parameters (BN folded host-side)
    pkeys = jax.random.split(k_par, depth + 2)
    gp_w, _ = init_linear(pkeys[0], in_channels, embed_channels, bias=False)
    gp_s, gp_t = init_bn(pkeys[1], embed_channels)
    block_params = [fold_block_params(init_block_params(pkeys[2 + d], embed_channels, groups))
                    for d in range(depth)]

    # ---- GridPool ----
    feat_proj = linear_bn_relu(feat, gp_w * gp_s, gp_t, tn=128)
    coord_np = np.asarray(coord)
    cluster_np, counts_np = grid_pool_cluster(coord_np, batch_np, grid_size)
    M = int(counts_np.shape[0])
    cluster = jnp.asarray(cluster_np)
    # segment mean/max pooling (order-independent -> segment ops; glue, not hot path)
    coord_pool = (jax.ops.segment_sum(coord, cluster, num_segments=M)
                  / jnp.asarray(counts_np, F32)[:, None])
    feat_pool = jax.ops.segment_max(feat_proj, cluster, num_segments=M)
    batch_pool_np = np.zeros(M, np.int64)
    batch_pool_np[cluster_np] = batch_np
    offset_pool = jnp.asarray(
        np.cumsum(np.bincount(batch_pool_np, minlength=len(counts_batch))), jnp.int32)

    # ---- knn_query on pooled points ----
    ref_idx_np = knn_query(neighbours, np.asarray(coord_pool), batch_pool_np)

    # ---- pad pooled points to the row-tile granularity ----
    NP_TILE = 128
    Npad = ((M + NP_TILE - 1) // NP_TILE) * NP_TILE
    pad = Npad - M
    feat_p = jnp.pad(feat_pool, ((0, pad), (0, 0)))
    coord_p = jnp.pad(coord_pool, ((0, pad), (0, 0)))
    idx_p = jnp.asarray(np.pad(ref_idx_np, ((0, pad), (0, 0))), jnp.int32)
    mask_p = (idx_p >= 0).astype(F32)                   # torch.sign(idx + 1)

    # ---- BlockSequence ----
    for fp in block_params:
        feat_p = run_block(feat_p, coord_p, idx_p, mask_p, fp, groups)

    feat_out = feat_p[:M]
    points_out = [coord_pool, feat_out, offset_pool]    # Encoder returns (points, cluster)
    jax.block_until_ready(feat_out)
    jax.block_until_ready(cluster)
    print("KERNEL_OK")
</pallas_src>

<mosaic_0001>
module attributes {stable_mosaic.version = 11 : i64} {
  func.func @_linear_bn_relu_kernel(%arg0: i32, %arg1: memref<128x8xf32, #tpu.memory_space<vmem>>, %arg2: memref<8x32xf32, #tpu.memory_space<vmem>>, %arg3: memref<1x32xf32, #tpu.memory_space<vmem>>, %arg4: memref<128x32xf32, #tpu.memory_space<vmem>>) attributes {dimension_semantics = [#tpu.dimension_semantics<parallel>], iteration_bounds = array<i64: 2>, scalar_prefetch = 0 : i64, scratch_operands = 0 : i64, tpu.core_type = #tpu.core_type<tc>, window_params = [{transform_indices = @transform_0, window_bounds = array<i64: 128, 8>}, {pipeline_mode = #tpu.pipeline_mode<synchronous>, transform_indices = @transform_1, window_bounds = array<i64: 8, 32>}, {pipeline_mode = #tpu.pipeline_mode<synchronous>, transform_indices = @transform_2, window_bounds = array<i64: 1, 32>}, {transform_indices = @transform_3, window_bounds = array<i64: 128, 32>}]} {
    %c0 = arith.constant 0 : index
    %c0_0 = arith.constant 0 : index
    %0 = vector.load %arg1[%c0, %c0_0] : memref<128x8xf32, #tpu.memory_space<vmem>>, vector<128x8xf32>
    %c0_1 = arith.constant 0 : index
    %c0_2 = arith.constant 0 : index
    %1 = vector.load %arg2[%c0_1, %c0_2] : memref<8x32xf32, #tpu.memory_space<vmem>>, vector<8x32xf32>
    %2 = arith.truncf %0 : vector<128x8xf32> to vector<128x8xbf16>
    %3 = arith.truncf %1 : vector<8x32xf32> to vector<8x32xbf16>
    %cst = arith.constant dense<0.000000e+00> : vector<128x32xf32>
    %4 = tpu.matmul %2, %3, %cst {dimension_numbers = #tpu.dot_dimension_numbers<[1], [0], [0], [1], [0, 0, 1, 1], [], []>} : vector<128x8xbf16>, vector<8x32xbf16>, vector<128x32xf32> -> vector<128x32xf32>
    %c0_3 = arith.constant 0 : index
    %c0_4 = arith.constant 0 : index
    %5 = vector.load %arg3[%c0_3, %c0_4] : memref<1x32xf32, #tpu.memory_space<vmem>>, vector<1x32xf32>
    %6 = vector.broadcast %5 : vector<1x32xf32> to vector<128x32xf32>
    %7 = arith.addf %4, %6 : vector<128x32xf32>
    %cst_5 = arith.constant 0.000000e+00 : f32
    %8 = vector.broadcast %cst_5 : f32 to vector<128x32xf32>
    %9 = arith.maximumf %7, %8 : vector<128x32xf32>
    %c0_6 = arith.constant 0 : index
    %c0_7 = arith.constant 0 : index
    %10 = vector.load %arg4[%c0_6, %c0_7] : memref<128x32xf32, #tpu.memory_space<vmem>>, vector<128x32xf32>
    tpu.vector_store %arg4[%c0_6, %c0_7], %9 {strides = array<i32>} : memref<128x32xf32, #tpu.memory_space<vmem>>, vector<128x32xf32>,
    return
  }
  func.func @transform_0(%arg0: i32) -> (i32, i32) {
    %c0_i32 = arith.constant 0 : i32
    %c0_i32_0 = arith.constant 0 : i32
    return %arg0, %c0_i32 : i32, i32
  }
  func.func @transform_1(%arg0: i32) -> (i32, i32) {
    %c0_i32 = arith.constant 0 : i32
    %c0_i32_0 = arith.constant 0 : i32
    %c0_i32_1 = arith.constant 0 : i32
    return %c0_i32, %c0_i32_0 : i32, i32
  }
  func.func @transform_2(%arg0: i32) -> (i32, i32) {
    %c0_i32 = arith.constant 0 : i32
    %c0_i32_0 = arith.constant 0 : i32
    %c0_i32_1 = arith.constant 0 : i32
    return %c0_i32, %c0_i32_0 : i32, i32
  }
  func.func @transform_3(%arg0: i32) -> (i32, i32) {
    %c0_i32 = arith.constant 0 : i32
    %c0_i32_0 = arith.constant 0 : i32
    return %arg0, %c0_i32 : i32, i32
  }
}

</mosaic_0001>

<llo_original>
// kernel: tpu_custom_call.1
$region0: #{tpu_custom_call.1}
  #allocation0 [shape = 'u32[]', space=smem, size = 0x4, offset = 0x4, fixed_abs, tag = 'smem constant byte address 0x4 - core index']
  #allocation1 [shape = 'u32[144,128]{1,0:T(1,128)}', space=vmem, size = 0x12000, scoped, tag = 'internal scratch']
  %s0 = inlined_call_operand.vmem [shape: f32[256,8], index: 0, kind: input, shape index: {}]
  %s1 = inlined_call_operand.vmem [shape: f32[8,32], index: 1, kind: input, shape index: {}]
  %s2 = inlined_call_operand.vmem [shape: f32[1,32], index: 2, kind: input, shape index: {}]
  %s3 = inlined_call_operand.vmem [shape: f32[256,32], index: 3, kind: output, shape index: {}]
  %s4 = sld [smem:[#allocation0]]
  $region45: #{tpu_custom_call.1} parent=0
    _
  %s6 = ssub.s32 1, %s4
  %s7 = scalar_select 0, %s6, %s4
  loop: start=0, step=1, limit=4
  $region2: #{tpu_custom_call.1} parent=0 // loop_pre_header
    _
  $region3: #{tpu_custom_call.1} parent=0 // loop_header
    %s9 = sphi 0, %s13
    %p10 = scmp.ge.s32.totalorder %s9, 4
    %s19 = sphi 0, %s21
    %s22 = sphi 0, %s19
    %s23 = sphi 0, %s22
    %s39 = sphi 0, %s23
    %s43 = sphi 0, %s43
    %s45 = sphi 0, %s43
    %s46 = sphi 0, %s45
    %s60 = sphi 0, %s46
    %s64 = sphi 0, %s64
    %s66 = sphi 0, %s64
    %s67 = sphi 0, %s66
    %s81 = sphi 0, %s67
    %s87 = sphi 0, %s89
    %s90 = sphi 0, %s87
    %s91 = sphi 0, %s90
    %s107 = sphi 0, %s91
  $region4: #{tpu_custom_call.1} parent=0 // loop_header_branch
    %12 = sbr.rel (%p10) target = $region8
  $region5: #{tpu_custom_call.1} parent=0 // loop_body
    %s14 = ssub.s32 %s9, 1
    %s15 = ssub.s32 %s9, 2
    %s16 = sadd.s32 %s9, 1
    %s17 = ssub.s32 %s9, %s16
    %p18 = scmp.eq.s32.totalorder %s17, 0
    %s20 = sadd.s32 %s19, 1
    %s21 = scalar_select %p18, %s19, %s20
    %p24 = pneg %p18
    %p25 = scmp.eq.s32.totalorder %s9, 1
    %p26 = por %p24, %p25
    %p27 = scmp.ne.s32.totalorder %s19, %s22
    %p28 = scmp.eq.s32.totalorder %s9, 0
    %p29 = por %p27, %p28
    %p30 = scmp.ne.s32.totalorder %s19, %s22
    %p31 = scmp.eq.s32.totalorder %s14, 1
    %p32 = por %p30, %p31
    %p33 = scmp.ne.s32.totalorder %s22, %s23
    %p34 = scmp.eq.s32.totalorder %s14, 0
    %p35 = por %p33, %p34
    %p36 = scmp.ne.s32.totalorder %s22, %s23
    %p37 = scmp.eq.s32.totalorder %s15, 1
    %p38 = por %p36, %p37
    %p40 = scmp.ne.s32.totalorder %s23, %s39
    %p41 = scmp.eq.s32.totalorder %s15, 0
    %p42 = por %p40, %p41
    %s44 = sadd.s32 %s43, 1
    %p47 = scmp.eq.s32.totalorder %s9, 1
    %p48 = scmp.ne.s32.totalorder %s43, %s45
    %p49 = scmp.eq.s32.totalorder %s9, 0
    %p50 = por %p48, %p49
    %p51 = scmp.ne.s32.totalorder %s43, %s45
    %p52 = scmp.eq.s32.totalorder %s14, 1
    %p53 = por %p51, %p52
    %p54 = scmp.ne.s32.totalorder %s45, %s46
    %p55 = scmp.eq.s32.totalorder %s14, 0
    %p56 = por %p54, %p55
    %p57 = scmp.ne.s32.totalorder %s45, %s46
    %p58 = scmp.eq.s32.totalorder %s15, 1
    %p59 = por %p57, %p58
    %p61 = scmp.ne.s32.totalorder %s46, %s60
    %p62 = scmp.eq.s32.totalorder %s15, 0
    %p63 = por %p61, %p62
    %s65 = sadd.s32 %s64, 1
    %p68 = scmp.eq.s32.totalorder %s9, 1
    %p69 = scmp.ne.s32.totalorder %s64, %s66
    %p70 = scmp.eq.s32.totalorder %s9, 0
    %p71 = por %p69, %p70
    %p72 = scmp.ne.s32.totalorder %s64, %s66
    %p73 = scmp.eq.s32.totalorder %s14, 1
    %p74 = por %p72, %p73
    %p75 = scmp.ne.s32.totalorder %s66, %s67
    %p76 = scmp.eq.s32.totalorder %s14, 0
    %p77 = por %p75, %p76
    %p78 = scmp.ne.s32.totalorder %s66, %s67
    %p79 = scmp.eq.s32.totalorder %s15, 1
    %p80 = por %p78, %p79
    %p82 = scmp.ne.s32.totalorder %s67, %s81
    %p83 = scmp.eq.s32.totalorder %s15, 0
    %p84 = por %p82, %p83
    %s85 = ssub.s32 %s9, %s16
    %p86 = scmp.eq.s32.totalorder %s85, 0
    %s88 = sadd.s32 %s87, 1
    %s89 = scalar_select %p86, %s87, %s88
    %p92 = pneg %p86
    %p93 = scmp.eq.s32.totalorder %s9, 1
    %p94 = por %p92, %p93
    %p95 = scmp.ne.s32.totalorder %s87, %s90
    %p96 = scmp.eq.s32.totalorder %s9, 0
    %p97 = por %p95, %p96
    %p98 = scmp.ne.s32.totalorder %s87, %s90
    %p99 = scmp.eq.s32.totalorder %s14, 1
    %p100 = por %p98, %p99
    %p101 = scmp.ne.s32.totalorder %s90, %s91
    %p102 = scmp.eq.s32.totalorder %s14, 0
    %p103 = por %p101, %p102
    %p104 = scmp.ne.s32.totalorder %s90, %s91
    %p105 = scmp.eq.s32.totalorder %s15, 1
    %p106 = por %p104, %p105
    %p108 = scmp.ne.s32.totalorder %s91, %s107
    %p109 = scmp.eq.s32.totalorder %s15, 0
    %p110 = por %p108, %p109
    %p111 = scmp.le.s32.totalorder 1, %s9
    %p112 = scmp.lt.s32.totalorder %s9, 3
    %p113 = pnand %p111, %p112
    %p114 = pneg %p113
    // Predicated region
    $region9: #{tpu_custom_call.1} parent=5 // pred_check
      _
    $region10: #{tpu_custom_call.1} parent=5 // pred_check_branch
      %116 = sbr.rel (%p113) target = $region12
    $region11: #{tpu_custom_call.1} parent=5 // pred_region
      %s117 = ssub.s32 %s9, 1
      // Predicated region
      $region13: #{tpu_custom_call.1} parent=11 // pred_check
        %p118 = pneg %p56
      $region14: #{tpu_custom_call.1} parent=11 // pred_check_branch
        %120 = sbr.rel (%p118) target = $region16
      $region15: #{tpu_custom_call.1} parent=11 // pred_region
        _
      $region16: #{tpu_custom_call.1} parent=11 // pred_fallthru
        _
      // Predicated region
      $region17: #{tpu_custom_call.1} parent=11 // pred_check
        %p121 = pneg %p77
      $region18: #{tpu_custom_call.1} parent=11 // pred_check_branch
        %123 = sbr.rel (%p121) target = $region20
      $region19: #{tpu_custom_call.1} parent=11 // pred_region
        _
      $region20: #{tpu_custom_call.1} parent=11 // pred_fallthru
        _
    $region12: #{tpu_custom_call.1} parent=5 // pred_fallthru
      _
    %p124 = scmp.lt.s32.totalorder %s9, 2
    // Predicated region
    $region21: #{tpu_custom_call.1} parent=5 // pred_check
      %p125 = pneg %p124
    $region22: #{tpu_custom_call.1} parent=5 // pred_check_branch
      %127 = sbr.rel (%p125) target = $region24
    $region23: #{tpu_custom_call.1} parent=5 // pred_region
      // Predicated region
      $region25: #{tpu_custom_call.1} parent=23 // pred_check
        %p128 = pneg %p29
      $region26: #{tpu_custom_call.1} parent=23 // pred_check_branch
        %130 = sbr.rel (%p128) target = $region28
      $region27: #{tpu_custom_call.1} parent=23 // pred_region
        %s131 = smul.u32 16, %s9
        %p132 = scmp.lt.s32.totalorder %s131, 31
        %s133 = scalar_select %p132, %s131, 31
        %s134 = smul.addr %s133, 8
        %s135 = scalar_lea.vmem %s0, %s134
        %s136 = smul.u32 16, %s9
      $region28: #{tpu_custom_call.1} parent=23 // pred_fallthru
        _
    $region24: #{tpu_custom_call.1} parent=5 // pred_fallthru
      _
    %p137 = scmp.le.s32.totalorder 1, %s9
    %p138 = scmp.lt.s32.totalorder %s9, 3
    %p139 = pnand %p137, %p138
    %p140 = pneg %p139
    // Predicated region
    $region29: #{tpu_custom_call.1} parent=5 // pred_check
      _
    $region30: #{tpu_custom_call.1} parent=5 // pred_check_branch
      %142 = sbr.rel (%p139) target = $region32
    $region31: #{tpu_custom_call.1} parent=5 // pred_region
      %s143 = ssub.s32 %s9, 1
      %s144 = smul.u32 16, %s14
      %p145 = scmp.lt.s32.totalorder %s144, 31
      %s146 = scalar_select %p145, %s144, 31
      %s147 = smul.addr %s146, 8
      %s148 = scalar_lea.vmem %s0, %s147
      %p149 = pneg %p35
      %p150 = pneg %p32
      %p151 = pneg %p56
      %p152 = pneg %p53
      %p153 = pneg %p77
      %p154 = pneg %p74
      %p155 = pneg %p103
      %p156 = pneg %p100
      %s157 = smul.u32 16, %s14
      %p158 = scmp.lt.s32.totalorder %s157, 31
      %s159 = scalar_select %p158, %s157, 31
      %s160 = smul.addr %s159, 8
      %s161 = scalar_lea.vmem %s3, %s160
      %s162 = smul.u32 16, %s14
      %p163 = scmp.lt.s32.totalorder %s162, 31
      %s164 = scalar_select %p163, %s162, 31
      %s165 = smul.addr %s164, 8
      %s166 = scalar_lea.vmem %s0, %s165
      %s167 = smul.u32 16, %s14
      %s168 = smul.u32 16, %s14
      %p169 = scmp.lt.s32.totalorder %s168, 31
      %s170 = scalar_select %p169, %s168, 31
      %s171 = smul.addr %s170, 8
      %s172 = scalar_lea.vmem %s3, %s171
      %s173 = smul.u32 16, %s14
      %v175 = vld [vmem:[%s166] sm:$0xff]
      %v176 = vld [vmem:[%s166 + $0x8] sm:$0xff]
      %v177 = vld [vmem:[%s166 + $0x10] sm:$0xff]
      %v178 = vld [vmem:[%s166 + $0x18] sm:$0xff]
      %v179 = vld [vmem:[%s166 + $0x20] sm:$0xff]
      %v180 = vld [vmem:[%s166 + $0x28] sm:$0xff]
      %v181 = vld [vmem:[%s166 + $0x30] sm:$0xff]
      %v182 = vld [vmem:[%s166 + $0x38] sm:$0xff]
      %v183 = vld [vmem:[%s166 + $0x40] sm:$0xff]
      %v184 = vld [vmem:[%s166 + $0x48] sm:$0xff]
      %v185 = vld [vmem:[%s166 + $0x50] sm:$0xff]
      %v186 = vld [vmem:[%s166 + $0x58] sm:$0xff]
      %v187 = vld [vmem:[%s166 + $0x60] sm:$0xff]
      %v188 = vld [vmem:[%s166 + $0x68] sm:$0xff]
      %v189 = vld [vmem:[%s166 + $0x70] sm:$0xff]
      %v190 = vld [vmem:[%s166 + $0x78] sm:$0xff]
      %v191 = vld [vmem:[%s1] sm:$0xff]
      %v192 = vpack.c.bf16 %v176, %v175
      %v193 = vpack.c.bf16 %v178, %v177
      %v194 = vpack.c.bf16 %v180, %v179
      %v195 = vpack.c.bf16 %v182, %v181
      %v196 = vpack.c.bf16 %v184, %v183
      %v197 = vpack.c.bf16 %v186, %v185
      %v198 = vpack.c.bf16 %v188, %v187
      %v199 = vpack.c.bf16 %v190, %v189
      %v200 = vpack.c.bf16 %v191, %v191
      %v201 = vld [vmem:[%s2] sm:$0x1]
      %v203 = vlaneseq
      %v204 = vshrl.u32 %v203, 7
      %v205 = vsub.s32 0, %v204
      %v206 = vrot.slane %v201, %v205
      %vm208 = vcmask 64512
      %v210 = vsel %vm208, %v192, 0
      %v213 = vsel %vm208, %v193, 0
      %v216 = vsel %vm208, %v194, 0
      %v219 = vsel %vm208, %v195, 0
      %v222 = vsel %vm208, %v196, 0
      %v225 = vsel %vm208, %v197, 0
      %v228 = vsel %vm208, %v198, 0
      %v231 = vsel %vm208, %v199, 0
      %vm233 = vcmask 1043456
      %v235 = vsel %vm233, %v200, 0
      %237 = vmatprep.subr.bf16.mxu0 0
      %238 = vmatpush1.bf16.msra.mxu0 %v235
      %239 = vmatprep.subr.bf16.mxu0 0
      %240 = vmatpush1.bf16.msra.mxu0 0
      %241 = vmatprep.subr.bf16.mxu0 0
      %242 = vmatpush1.bf16.msra.mxu0 0
      %243 = vmatprep.subr.bf16.mxu0 0
      %244 = vmatpush1.bf16.msra.mxu0 0
      %245 = vmatprep.subr.bf16.mxu0 0
      %246 = vmatpush1.bf16.msra.mxu0 0
      %247 = vmatprep.subr.bf16.mxu0 0
      %248 = vmatpush1.bf16.msra.mxu0 0
      %249 = vmatprep.subr.bf16.mxu0 0
      %250 = vmatpush1.bf16.msra.mxu0 0
      %251 = vmatprep.subr.bf16.mxu0 0
      %252 = vmatpush1.bf16.msra.mxu0 0
      %253 = vmatprep.subr.bf16.mxu0 0
      %254 = vmatpush1.bf16.msra.mxu0 0
      %255 = vmatprep.subr.bf16.mxu0 0
      %256 = vmatpush1.bf16.msra.mxu0 0
      %257 = vmatprep.subr.bf16.mxu0 0
      %258 = vmatpush1.bf16.msra.mxu0 0
      %259 = vmatprep.subr.bf16.mxu0 0
      %260 = vmatpush1.bf16.msra.mxu0 0
      %261 = vmatprep.subr.bf16.mxu0 0
      %262 = vmatpush1.bf16.msra.mxu0 0
      %263 = vmatprep.subr.bf16.mxu0 0
      %264 = vmatpush1.bf16.msra.mxu0 0
      %265 = vmatprep.subr.bf16.mxu0 0
      %266 = vmatpush1.bf16.msra.mxu0 0
      %267 = vmatprep.subr.bf16.mxu0 0
      %268 = vmatpush1.bf16.msra.mxu0 0
      %269 = vmatprep.mubr.bf16.mxu0 0
      %270 = vmatmul.mubr.bf16.gmra.mrb[0].mxu0 %v210
      %v271 = vpop.f32.mrb[0].mxu0
      %v272 = vadd.f32 %v206, %v271
      %v273 = vpop.f32.mrb[0].mxu0
      %v274 = vpop.f32.mrb[0].mxu0
      %v275 = vadd.f32 %v206, %v274
      %v276 = vpop.f32.mrb[0].mxu0
      %277 = vmatprep.mubr.bf16.mxu0 0
      %278 = vmatmul.mubr.bf16.gmra.mrb[0].mxu0 %v213
      %v279 = vpop.f32.mrb[0].mxu0
      %v280 = vadd.f32 %v206, %v279
      %v281 = vpop.f32.mrb[0].mxu0
      %v282 = vpop.f32.mrb[0].mxu0
      %v283 = vadd.f32 %v206, %v282
      %v284 = vpop.f32.mrb[0].mxu0
      %285 = vmatprep.mubr.bf16.mxu0 0
      %286 = vmatmul.mubr.bf16.gmra.mrb[0].mxu0 %v216
      %v287 = vpop.f32.mrb[0].mxu0
      %v288 = vadd.f32 %v206, %v287
      %v289 = vpop.f32.mrb[0].mxu0
      %v290 = vpop.f32.mrb[0].mxu0
      %v291 = vadd.f32 %v206, %v290
      %v292 = vpop.f32.mrb[0].mxu0
      %293 = vmatprep.mubr.bf16.mxu0 0
      %294 = vmatmul.mubr.bf16.gmra.mrb[0].mxu0 %v219
      %v295 = vpop.f32.mrb[0].mxu0
      %v296 = vadd.f32 %v206, %v295
      %v297 = vpop.f32.mrb[0].mxu0
      %v298 = vpop.f32.mrb[0].mxu0
      %v299 = vadd.f32 %v206, %v298
      %v300 = vpop.f32.mrb[0].mxu0
      %301 = vmatprep.mubr.bf16.mxu0 0
      %302 = vmatmul.mubr.bf16.gmra.mrb[0].mxu0 %v222
      %v303 = vpop.f32.mrb[0].mxu0
      %v304 = vadd.f32 %v206, %v303
      %v305 = vpop.f32.mrb[0].mxu0
      %v306 = vpop.f32.mrb[0].mxu0
      %v307 = vadd.f32 %v206, %v306
      %v308 = vpop.f32.mrb[0].mxu0
      %309 = vmatprep.mubr.bf16.mxu0 0
      %310 = vmatmul.mubr.bf16.gmra.mrb[0].mxu0 %v225
      %v311 = vpop.f32.mrb[0].mxu0
      %v312 = vadd.f32 %v206, %v311
      %v313 = vpop.f32.mrb[0].mxu0
      %v314 = vpop.f32.mrb[0].mxu0
      %v315 = vadd.f32 %v206, %v314
      %v316 = vpop.f32.mrb[0].mxu0
      %317 = vmatprep.mubr.bf16.mxu0 0
      %318 = vmatmul.mubr.bf16.gmra.mrb[0].mxu0 %v228
      %v319 = vpop.f32.mrb[0].mxu0
      %v320 = vadd.f32 %v206, %v319
      %v321 = vpop.f32.mrb[0].mxu0
      %v322 = vpop.f32.mrb[0].mxu0
      %v323 = vadd.f32 %v206, %v322
      %v324 = vpop.f32.mrb[0].mxu0
      %325 = vmatprep.mubr.bf16.mxu0 0
      %326 = vmatmul.mubr.bf16.gmra.mrb[0].mxu0 %v231
      %v327 = vpop.f32.mrb[0].mxu0
      %v328 = vadd.f32 %v206, %v327
      %v329 = vpop.f32.mrb[0].mxu0
      %v330 = vpop.f32.mrb[0].mxu0
      %v331 = vadd.f32 %v206, %v330
      %v332 = vpop.f32.mrb[0].mxu0
      %333 = vdwg.mxu0
      %v334 = vmax.f32 %v272, 0.0
      %v335 = vmax.f32 %v275, 0.0
      %v336 = vmax.f32 %v280, 0.0
      %v337 = vmax.f32 %v283, 0.0
      %v338 = vmax.f32 %v288, 0.0
      %v339 = vmax.f32 %v291, 0.0
      %v340 = vmax.f32 %v296, 0.0
      %v341 = vmax.f32 %v299, 0.0
      %v342 = vmax.f32 %v304, 0.0
      %v343 = vmax.f32 %v307, 0.0
      %v344 = vmax.f32 %v312, 0.0
      %v345 = vmax.f32 %v315, 0.0
      %v346 = vmax.f32 %v320, 0.0
      %v347 = vmax.f32 %v323, 0.0
      %v348 = vmax.f32 %v328, 0.0
      %v349 = vmax.f32 %v331, 0.0
      %vm350 = vcmask 261120
      %351 = vst.msk [vmem:[%s172] sm:$0xff] %vm350, %v334
      %352 = vst.msk [vmem:[%s172 + $0x8] sm:$0xff] %vm350, %v335
      %353 = vst.msk [vmem:[%s172 + $0x10] sm:$0xff] %vm350, %v336
      %354 = vst.msk [vmem:[%s172 + $0x18] sm:$0xff] %vm350, %v337
      %355 = vst.msk [vmem:[%s172 + $0x20] sm:$0xff] %vm350, %v338
      %356 = vst.msk [vmem:[%s172 + $0x28] sm:$0xff] %vm350, %v339
      %357 = vst.msk [vmem:[%s172 + $0x30] sm:$0xff] %vm350, %v340
      %358 = vst.msk [vmem:[%s172 + $0x38] sm:$0xff] %vm350, %v341
      %359 = vst.msk [vmem:[%s172 + $0x40] sm:$0xff] %vm350, %v342
      %360 = vst.msk [vmem:[%s172 + $0x48] sm:$0xff] %vm350, %v343
      %361 = vst.msk [vmem:[%s172 + $0x50] sm:$0xff] %vm350, %v344
      %362 = vst.msk [vmem:[%s172 + $0x58] sm:$0xff] %vm350, %v345
      %363 = vst.msk [vmem:[%s172 + $0x60] sm:$0xff] %vm350, %v346
      %364 = vst.msk [vmem:[%s172 + $0x68] sm:$0xff] %vm350, %v347
      %365 = vst.msk [vmem:[%s172 + $0x70] sm:$0xff] %vm350, %v348
      %366 = vst.msk [vmem:[%s172 + $0x78] sm:$0xff] %vm350, %v349
      %s367 = smul.u32 16, %s14
      %p368 = scmp.lt.s32.totalorder %s367, 31
      %s369 = scalar_select %p368, %s367, 31
      %s370 = smul.addr %s369, 8
      %s371 = scalar_lea.vmem %s3, %s370
      // Predicated region
      $region33: #{tpu_custom_call.1} parent=31 // pred_check
        %p372 = pneg %p100
      $region34: #{tpu_custom_call.1} parent=31 // pred_check_branch
        %374 = sbr.rel (%p372) target = $region36
      $region35: #{tpu_custom_call.1} parent=31 // pred_region
        %s375 = smul.u32 16, %s14
      $region36: #{tpu_custom_call.1} parent=31 // pred_fallthru
        _
    $region32: #{tpu_custom_call.1} parent=5 // pred_fallthru
      _
    %p376 = scmp.le.s32.totalorder 2, %s9
    // Predicated region
    $region37: #{tpu_custom_call.1} parent=5 // pred_check
      %p377 = pneg %p376
    $region38: #{tpu_custom_call.1} parent=5 // pred_check_branch
      %379 = sbr.rel (%p377) target = $region40
    $region39: #{tpu_custom_call.1} parent=5 // pred_region
      %s380 = ssub.s32 %s9, 2
      // Predicated region
      $region41: #{tpu_custom_call.1} parent=39 // pred_check
        %p381 = pneg %p106
      $region42: #{tpu_custom_call.1} parent=39 // pred_check_branch
        %383 = sbr.rel (%p381) target = $region44
      $region43: #{tpu_custom_call.1} parent=39 // pred_region
        %s384 = smul.u32 16, %s15
        %p385 = scmp.lt.s32.totalorder %s384, 31
        %s386 = scalar_select %p385, %s384, 31
        %s387 = smul.addr %s386, 8
        %s388 = scalar_lea.vmem %s3, %s387
      $region44: #{tpu_custom_call.1} parent=39 // pred_fallthru
        _
    $region40: #{tpu_custom_call.1} parent=5 // pred_fallthru
      _
  $region6: #{tpu_custom_call.1} parent=0 // loop_footer
    %s13 = sadd.s32 1, %s9
  $region7: #{tpu_custom_call.1} parent=0 // loop_footer_branch
    %8 = sbr.rel target = $region3
  $region8: #{tpu_custom_call.1} parent=0 // loop_exit
    _

</llo_original>
